<compile_context>
chip_gen: v7x
topology: tpu7x:2x2x1
jax: 0.10.0
libtpu: 0.0.40
codegen_flags: <defaults>
</compile_context>

<pallas_src>
import functools

import jax
import jax.numpy as jnp
from jax import lax
from jax.experimental import pallas as pl
from jax.experimental.pallas import tpu as pltpu

LANES = 128
SUBLANES = 8
VREG_ELEMS = SUBLANES * LANES      # 1024: minimal host-side zero-pad granule
MAX_TILE_R = 4096                  # 4096*128*4B = 2 MiB per f32 input buffer


def _relmse_reduce_kernel(pred_ref, targ_ref, acc_ref, *,
                          epsilon, rows, tile_r, blocks_per_slice, need_mask):
    """Accumulates (8,128)-shaped partial sums of (p-t)^2/(t^2+eps) into acc_ref.

    acc_ref is the (per-slice) output block, resident across the inner
    ("arbitrary") grid axis; init at k==0, accumulate every step.
    """
    k = pl.program_id(1)

    @pl.when(k == 0)
    def _():
        acc_ref[...] = jnp.zeros_like(acc_ref)

    p = pred_ref[...].astype(jnp.float32)
    t = targ_ref[...].astype(jnp.float32)

    if need_mask:
        # Intended (unclamped) global row of every element in this tile; rows
        # beyond the real array (garbage reads / duplicated clamped blocks)
        # are zeroed so they contribute exactly 0 to the sum.
        s = pl.program_id(0)
        row0 = (s * blocks_per_slice + k) * tile_r
        local = lax.broadcasted_iota(jnp.int32, (tile_r, LANES), 0)
        valid = (row0 + local) < rows
        p = jnp.where(valid, p, 0.0)
        t = jnp.where(valid, t, 0.0)

    d = p - t
    contrib = (d * d) / (t * t + jnp.float32(epsilon))
    # (tile_r,128) -> (tile_r//8, 8, 128); reduce leading axis = cheap VPU adds,
    # no cross-lane (XLU) traffic inside the hot loop.
    acc_ref[...] += jnp.sum(
        contrib.reshape(tile_r // SUBLANES, SUBLANES, LANES), axis=0)


def _relmse_elem_kernel(pred_ref, targ_ref, out_ref, *, epsilon):
    """Elementwise relative MSE (reduction='none' path)."""
    p = pred_ref[...].astype(jnp.float32)
    t = targ_ref[...].astype(jnp.float32)
    d = p - t
    out_ref[...] = ((d * d) / (t * t + jnp.float32(epsilon))).astype(out_ref.dtype)


def _prep(x):
    """Flatten row-major into a lane-dense (rows, 128) slab, native dtype.

    Pads with zeros only when needed, and only up to the next multiple of one
    vreg (1024 elements); zeros contribute exactly 0 to the relative-MSE sum.
    """
    n = x.size
    n_pad = pl.cdiv(n, VREG_ELEMS) * VREG_ELEMS
    xf = x.reshape(-1)
    if n_pad != n:                              # no-op for typical DL shapes
        xf = jnp.pad(xf, (0, n_pad - n))
    return xf.reshape(n_pad // LANES, LANES)


def rel_mse_loss(pred, target, epsilon=0.001, reduction="mean",
                 max_tile_r=MAX_TILE_R):
    assert pred.shape == target.shape
    n = pred.size
    pf = _prep(pred)
    tf = _prep(target)
    rows = pf.shape[0]                          # always a multiple of 8

    tile_r = rows if rows <= max_tile_r else max_tile_r   # max_tile_r % 8 == 0
    num_blocks = pl.cdiv(rows, tile_r)

    if reduction in ("mean", "sum"):
        # Leading parallel axis: lets v7x megacore stream HBM with both TCs.
        num_slices = 2 if num_blocks >= 2 else 1
        bps = pl.cdiv(num_blocks, num_slices)   # blocks per slice
        need_mask = (num_slices * bps * tile_r) != rows

        def in_map(s, k):
            b = s * bps + k
            if need_mask:
                # Clamp so the DMA never goes out of bounds; the in-kernel row
                # mask zeroes any duplicated/garbage contribution.
                b = jnp.minimum(b, num_blocks - 1)
            return (b, 0)

        kernel = functools.partial(
            _relmse_reduce_kernel, epsilon=float(epsilon), rows=rows,
            tile_r=tile_r, blocks_per_slice=bps, need_mask=need_mask)

        partials = pl.pallas_call(
            kernel,
            out_shape=jax.ShapeDtypeStruct((num_slices * SUBLANES, LANES),
                                           jnp.float32),
            grid_spec=pltpu.PrefetchScalarGridSpec(
                num_scalar_prefetch=0,
                grid=(num_slices, bps),
                in_specs=[pl.BlockSpec((tile_r, LANES), in_map),
                          pl.BlockSpec((tile_r, LANES), in_map)],
                out_specs=pl.BlockSpec((SUBLANES, LANES), lambda s, k: (s, 0)),
            ),
            compiler_params=pltpu.CompilerParams(
                dimension_semantics=("parallel", "arbitrary")),
        )(pf, tf)

        total = jnp.sum(partials)               # tiny final cross-lane reduce
        if reduction == "mean":
            return total / jnp.float32(n)
        return total
    else:
        # PyTorch branch prints a message and returns the elementwise tensor.
        print("Param reduction should be 'mean' or 'sum'.")
        out_dtype = jnp.result_type(pred.dtype, target.dtype)
        if not jnp.issubdtype(out_dtype, jnp.floating):
            out_dtype = jnp.float32
        kernel = functools.partial(_relmse_elem_kernel, epsilon=float(epsilon))
        out = pl.pallas_call(
            kernel,
            out_shape=jax.ShapeDtypeStruct((rows, LANES), out_dtype),
            grid_spec=pltpu.PrefetchScalarGridSpec(
                num_scalar_prefetch=0,
                grid=(num_blocks,),
                in_specs=[pl.BlockSpec((tile_r, LANES), lambda i: (i, 0)),
                          pl.BlockSpec((tile_r, LANES), lambda i: (i, 0))],
                out_specs=pl.BlockSpec((tile_r, LANES), lambda i: (i, 0)),
            ),
            compiler_params=pltpu.CompilerParams(
                dimension_semantics=("parallel",)),
        )(pf, tf)
        return out.reshape(-1)[:n].reshape(pred.shape)


if __name__ == "__main__":
    key = jax.random.PRNGKey(0)
    k1, k2 = jax.random.split(key)
    # NCHW-like input (batch=2, channels=4, spatial=16x16).
    pred = jax.random.normal(k1, (2, 4, 16, 16), dtype=jnp.float32)
    target = jax.random.normal(k2, (2, 4, 16, 16), dtype=jnp.float32)

    loss_mean = jax.block_until_ready(rel_mse_loss(pred, target, reduction="mean"))
    loss_sum = jax.block_until_ready(rel_mse_loss(pred, target, reduction="sum"))

    ref = (pred - target) ** 2 / (target ** 2 + 0.001)
    assert jnp.allclose(loss_mean, ref.mean(), rtol=1e-5, atol=1e-6)
    assert jnp.allclose(loss_sum, ref.sum(), rtol=1e-5, atol=1e-4)

    # Exercise the ragged / multi-slice / masked path with a tiny forced tile:
    # n=5100 -> pad to 5120 elems -> rows=40; tile_r=16 -> 3 blocks over 2
    # slices, so the clamp + row-mask logic is active.
    k3, k4 = jax.random.split(k2)
    p2 = jax.random.normal(k3, (1, 5, 30, 34), dtype=jnp.float32)
    t2 = jax.random.normal(k4, (1, 5, 30, 34), dtype=jnp.float32)
    got = jax.block_until_ready(
        rel_mse_loss(p2, t2, reduction="sum", max_tile_r=16))
    ref2 = ((p2 - t2) ** 2 / (t2 ** 2 + 0.001)).sum()
    assert jnp.allclose(got, ref2, rtol=1e-4, atol=1e-2)

    print("KERNEL_OK")
</pallas_src>

<mosaic_0001>
module attributes {stable_mosaic.version = 11 : i64} {
  func.func @_relmse_reduce_kernel(%arg0: i32, %arg1: i32, %arg2: memref<16x128xf32, #tpu.memory_space<vmem>>, %arg3: memref<16x128xf32, #tpu.memory_space<vmem>>, %arg4: memref<8x128xf32, #tpu.memory_space<vmem>>) attributes {dimension_semantics = [#tpu.dimension_semantics<parallel>, #tpu.dimension_semantics<arbitrary>], iteration_bounds = array<i64: 1, 1>, scalar_prefetch = 0 : i64, scratch_operands = 0 : i64, tpu.core_type = #tpu.core_type<tc>, window_params = [{transform_indices = @transform_0, window_bounds = array<i64: 16, 128>}, {transform_indices = @transform_1, window_bounds = array<i64: 16, 128>}, {transform_indices = @transform_2, window_bounds = array<i64: 8, 128>}]} {
    %c0_i32 = arith.constant 0 : i32
    %0 = arith.cmpi eq, %arg1, %c0_i32 : i32
    %1 = arith.extui %0 : i1 to i32
    %c0_i32_0 = arith.constant 0 : i32
    %2 = arith.cmpi ne, %1, %c0_i32_0 : i32
    scf.if %2 {
      %cst_9 = arith.constant 0.000000e+00 : f32
      %16 = vector.broadcast %cst_9 : f32 to vector<8x128xf32>
      %c0_10 = arith.constant 0 : index
      %c0_11 = arith.constant 0 : index
      %17 = vector.load %arg4[%c0_10, %c0_11] : memref<8x128xf32, #tpu.memory_space<vmem>>, vector<8x128xf32>
      tpu.vector_store %arg4[%c0_10, %c0_11], %16 {strides = array<i32>} : memref<8x128xf32, #tpu.memory_space<vmem>>, vector<8x128xf32>,
    } else {
    }
    %c0 = arith.constant 0 : index
    %c0_1 = arith.constant 0 : index
    %3 = vector.load %arg2[%c0, %c0_1] : memref<16x128xf32, #tpu.memory_space<vmem>>, vector<16x128xf32>
    %c0_2 = arith.constant 0 : index
    %c0_3 = arith.constant 0 : index
    %4 = vector.load %arg3[%c0_2, %c0_3] : memref<16x128xf32, #tpu.memory_space<vmem>>, vector<16x128xf32>
    %5 = arith.subf %3, %4 : vector<16x128xf32>
    %6 = arith.mulf %5, %5 : vector<16x128xf32>
    %7 = arith.mulf %4, %4 : vector<16x128xf32>
    %cst = arith.constant 1.000000e-03 : f32
    %8 = vector.broadcast %cst : f32 to vector<16x128xf32>
    %9 = arith.addf %7, %8 : vector<16x128xf32>
    %10 = arith.divf %6, %9 : vector<16x128xf32>
    %c0_4 = arith.constant 0 : index
    %c0_5 = arith.constant 0 : index
    %11 = vector.load %arg4[%c0_4, %c0_5] : memref<8x128xf32, #tpu.memory_space<vmem>>, vector<8x128xf32>
    %12 = vector.shape_cast %10 : vector<16x128xf32> to vector<2x8x128xf32>
    %cst_6 = arith.constant dense<0.000000e+00> : vector<8x128xf32>
    %13 = vector.multi_reduction <add>, %12, %cst_6 [0] : vector<2x8x128xf32> to vector<8x128xf32>
    %14 = arith.addf %11, %13 : vector<8x128xf32>
    %c0_7 = arith.constant 0 : index
    %c0_8 = arith.constant 0 : index
    %15 = vector.load %arg4[%c0_7, %c0_8] : memref<8x128xf32, #tpu.memory_space<vmem>>, vector<8x128xf32>
    tpu.vector_store %arg4[%c0_7, %c0_8], %14 {strides = array<i32>} : memref<8x128xf32, #tpu.memory_space<vmem>>, vector<8x128xf32>,
    return
  }
  func.func @transform_0(%arg0: i32, %arg1: i32) -> (i32, i32) {
    %c1_i32 = arith.constant 1 : i32
    %0 = arith.muli %arg0, %c1_i32 : i32
    %1 = arith.addi %0, %arg1 : i32
    %c0_i32 = arith.constant 0 : i32
    %c0_i32_0 = arith.constant 0 : i32
    return %1, %c0_i32 : i32, i32
  }
  func.func @transform_1(%arg0: i32, %arg1: i32) -> (i32, i32) {
    %c1_i32 = arith.constant 1 : i32
    %0 = arith.muli %arg0, %c1_i32 : i32
    %1 = arith.addi %0, %arg1 : i32
    %c0_i32 = arith.constant 0 : i32
    %c0_i32_0 = arith.constant 0 : i32
    return %1, %c0_i32 : i32, i32
  }
  func.func @transform_2(%arg0: i32, %arg1: i32) -> (i32, i32) {
    %c0_i32 = arith.constant 0 : i32
    %c0_i32_0 = arith.constant 0 : i32
    return %arg0, %c0_i32 : i32, i32
  }
}

</mosaic_0001>

<llo_original>
// kernel: tpu_custom_call.1
$region0: #{tpu_custom_call.1}
  #allocation0 [shape = 'u32[]', space=smem, size = 0x4, offset = 0x4, fixed_abs, tag = 'smem constant byte address 0x4 - core index']
  #allocation1 [shape = 'u32[144,128]{1,0:T(1,128)}', space=vmem, size = 0x12000, scoped, tag = 'internal scratch']
  %s0 = inlined_call_operand.hbm [shape: f32[16,128], index: 0, kind: input, shape index: {}]
  %s1 = inlined_call_operand.hbm [shape: f32[16,128], index: 1, kind: input, shape index: {}]
  %s2 = inlined_call_operand.hbm [shape: f32[8,128], index: 2, kind: output, shape index: {}]
  %s3 = sld [smem:[#allocation0]]
  $region30: #{tpu_custom_call.1} parent=0
    _
  %s5 = ssub.s32 1, %s3
  %s6 = scalar_select 0, %s5, %s3
  $region1: #{tpu_custom_call.1} parent=0
    #allocation2 [shape = 'u8[8192]{0}', space=vmem, size = 0x2000, scoped, tag = 'input window, operand 0, single buffered']
    #allocation3 [shape = 's32[1]{0}', space=sflag, size = 0x4, scoped, tag = 'scoped memory for tpu_custom_call.1']
    #allocation4 [shape = 's32[1]{0}', space=sflag, size = 0x4, scoped, tag = 'scoped memory for tpu_custom_call.1']
    #allocation5 [shape = 'u8[8192]{0}', space=vmem, size = 0x2000, scoped, tag = 'input window, operand 1, single buffered']
    #allocation6 [shape = 's32[1]{0}', space=sflag, size = 0x4, scoped, tag = 'scoped memory for tpu_custom_call.1']
    #allocation7 [shape = 'u8[4096]{0}', space=vmem, size = 0x1000, scoped, tag = 'output window, operand 0, single buffered']
    %7 = vsyncpa [#allocation3], 0
    %8 = vsyncpa [#allocation6], 0
    %9 = vsyncpa [#allocation4], 0
    // Predicated region
    $region2: #{tpu_custom_call.1} parent=1 // pred_check
      _
    $region3: #{tpu_custom_call.1} parent=1 // pred_check_branch
      %11 = sbr.rel (0) target = $region5
    $region4: #{tpu_custom_call.1} parent=1 // pred_region
      %s12 = sadd.s32 0, 0
      %s13 = smul.u32 2, %s12
      %s15 = ssub.s32 256, 256
      %16 = vsyncadd [#allocation3], %s15
      %s17 = smul.addr %s13, 128
      %s18 = scalar_lea.hbm %s0, %s17
      %s19 = sshll.u32 [#allocation2], 4
      %s20 = int_to_ptr.vmem [resolvable:$true] %s19
      %25 = dma.hbm_to_vmem [thread:$0]  %s18, 256, %s20, [#allocation3], 128, 128, 8
    $region5: #{tpu_custom_call.1} parent=1 // pred_fallthru
      _
    // Predicated region
    $region6: #{tpu_custom_call.1} parent=1 // pred_check
      _
    $region7: #{tpu_custom_call.1} parent=1 // pred_check_branch
      %27 = sbr.rel (0) target = $region9
    $region8: #{tpu_custom_call.1} parent=1 // pred_region
      %s28 = sadd.s32 0, 0
      %s29 = smul.u32 2, %s28
      %s31 = ssub.s32 256, 256
      %32 = vsyncadd [#allocation6], %s31
      %s33 = smul.addr %s29, 128
      %s34 = scalar_lea.hbm %s1, %s33
      %s35 = sshll.u32 [#allocation5], 4
      %s36 = int_to_ptr.vmem [resolvable:$true] %s35
      %41 = dma.hbm_to_vmem [thread:$0]  %s34, 256, %s36, [#allocation6], 128, 128, 8
    $region9: #{tpu_custom_call.1} parent=1 // pred_fallthru
      _
    // Predicated region
    $region10: #{tpu_custom_call.1} parent=1 // pred_check
      _
    $region11: #{tpu_custom_call.1} parent=1 // pred_check_branch
      %43 = sbr.rel (0) target = $region13
    $region12: #{tpu_custom_call.1} parent=1 // pred_region
      %44 = dma.done [#allocation3], 256
    $region13: #{tpu_custom_call.1} parent=1 // pred_fallthru
      _
    // Predicated region
    $region14: #{tpu_custom_call.1} parent=1 // pred_check
      _
    $region15: #{tpu_custom_call.1} parent=1 // pred_check_branch
      %46 = sbr.rel (0) target = $region17
    $region16: #{tpu_custom_call.1} parent=1 // pred_region
      %47 = dma.done [#allocation6], 256
    $region17: #{tpu_custom_call.1} parent=1 // pred_fallthru
      _
    %s48 = sadd.s32 0, 0
    %s49 = smul.u32 2, %s48
    %s50 = sadd.s32 0, 0
    %s51 = smul.u32 2, %s50
    %p52 = scmp.eq.s32.totalorder 0, 0
    // Predicated region
    $region18: #{tpu_custom_call.1} parent=1 // pred_check
      %p53 = pneg %p52
    $region19: #{tpu_custom_call.1} parent=1 // pred_check_branch
      %55 = sbr.rel (%p53) target = $region21
    $region20: #{tpu_custom_call.1} parent=1 // pred_region
      %56 = vst [vmem:[#allocation7] sm:$0xff] 0.0
    $region21: #{tpu_custom_call.1} parent=1 // pred_fallthru
      _
    %v57 = vld [vmem:[#allocation2] sm:$0xff]
    %v58 = vld [vmem:[#allocation2 + $0x8] sm:$0xff]
    %v59 = vld [vmem:[#allocation5] sm:$0xff]
    %v60 = vld [vmem:[#allocation5 + $0x8] sm:$0xff]
    %v61 = vsub.f32 %v57, %v59
    %v62 = vsub.f32 %v58, %v60
    %v63 = vmul.f32 %v61, %v61
    %v64 = vmul.f32 %v62, %v62
    %v65 = vmul.f32 %v59, %v59
    %v66 = vmul.f32 %v60, %v60
    %v67 = vadd.f32 %v65, 0.001
    %v68 = vadd.f32 %v66, 0.001
    %v69 = vrcp.pop %v67
    %v70 = vmul.f32 %v63, %v69
    %v71 = vrcp.pop %v68
    %v72 = vmul.f32 %v64, %v71
    %v73 = vld [vmem:[#allocation7] sm:$0xff]
    %v74 = vadd.f32 %v70, %v72
    %v75 = vadd.f32 %v73, %v74
    %76 = vst [vmem:[#allocation7] sm:$0xff] %v75
    // Predicated region
    $region22: #{tpu_custom_call.1} parent=1 // pred_check
      _
    $region23: #{tpu_custom_call.1} parent=1 // pred_check_branch
      %78 = sbr.rel (0) target = $region25
    $region24: #{tpu_custom_call.1} parent=1 // pred_region
      %s80 = ssub.s32 128, 128
      %81 = vsyncadd [#allocation4], %s80
      %s83 = sshll.u32 [#allocation7], 4
      %s84 = int_to_ptr.vmem [resolvable:$true] %s83
      %86 = dma.vmem_to_hbm [thread:$0]  %s84, 128, %s2, [#allocation4]
    $region25: #{tpu_custom_call.1} parent=1 // pred_fallthru
      _
    // Predicated region
    $region26: #{tpu_custom_call.1} parent=1 // pred_check
      _
    $region27: #{tpu_custom_call.1} parent=1 // pred_check_branch
      %88 = sbr.rel (0) target = $region29
    $region28: #{tpu_custom_call.1} parent=1 // pred_region
      %89 = dma.done [#allocation4], 128
    $region29: #{tpu_custom_call.1} parent=1 // pred_fallthru
      _
    %90 = vsyncpa [#allocation3], 1
    %91 = vsyncpa [#allocation6], 1
    %92 = vsyncpa [#allocation4], 1

</llo_original>
